<compile_context>
chip_gen: v7x
topology: tpu7x:2x2x1
jax: 0.10.0
libtpu: 0.0.40
codegen_flags: <defaults>
</compile_context>

<pallas_src>
import jax
import jax.numpy as jnp
from jax.experimental import pallas as pl
from jax.experimental.pallas import tpu as pltpu


def mlp_kernel(xT_ref, w1_ref, b1_ref, w2_ref, b2_ref, o_ref):
    # fc1 in transposed layout: (50, 10) @ (10, TB) -> (50, TB); batch on the lane axis.
    h = jnp.dot(w1_ref[...], xT_ref[...], preferred_element_type=jnp.float32)
    # Bias (50, 1) broadcasts across lanes; bias-add + ReLU on fully packed vregs, f32.
    h = jnp.maximum(h + b1_ref[...], 0.0)
    # fc2: per-sample 50-element dot = VPU multiply by (50, 1) column + sublane reduce.
    out = jnp.sum(h * w2_ref[...], axis=0, keepdims=True)          # (1, TB)
    # b2 is a scalar held in SMEM.
    o_ref[...] = (out + b2_ref[0, 0]).astype(o_ref.dtype)


def mynet_forward(x, w1, b1, w2col, b2, *, tb=512, compute_dtype=jnp.float32):
    """Forward pass of myNet.

    x:     (B, 10)  float32, PyTorch-style row-major batch
    w1:    (50, 10) fc1.weight (PyTorch layout, used directly in transposed dataflow)
    b1:    (50, 1)  fc1.bias as a column
    w2col: (50, 1)  fc2.weight transposed to a column
    b2:    (1, 1)   fc2.bias scalar (goes to SMEM)
    returns (B, 1) float32
    """
    B = x.shape[0]
    # Transpose so batch is the 128-lane axis; pad batch up to a multiple of the tile.
    xT = x.T.astype(compute_dtype)                                  # (10, B)
    n_tiles = pl.cdiv(B, tb)
    b_pad = n_tiles * tb
    if b_pad != B:
        xT = jnp.pad(xT, ((0, 0), (0, b_pad - B)))

    outT = pl.pallas_call(
        mlp_kernel,
        out_shape=jax.ShapeDtypeStruct((1, b_pad), jnp.float32),
        grid_spec=pl.GridSpec(
            grid=(n_tiles,),
            in_specs=[
                # activations: stream one (10, TB) lane-dense tile per grid step
                pl.BlockSpec((10, tb), lambda i: (0, i)),
                # weights / biases: constant index_map -> DMA'd once, VMEM-resident
                pl.BlockSpec((50, 10), lambda i: (0, 0)),
                pl.BlockSpec((50, 1), lambda i: (0, 0)),
                pl.BlockSpec((50, 1), lambda i: (0, 0)),
                # scalar bias lives in SMEM (no padded VMEM tile)
                pl.BlockSpec(memory_space=pltpu.MemorySpace.SMEM),
            ],
            # lane-dense output slab (1, TB) instead of a masked (B, 1) store
            out_specs=pl.BlockSpec((1, tb), lambda i: (0, i)),
        ),
        compiler_params=pltpu.CompilerParams(
            # independent batch tiles -> shard across TensorCores on v7x
            dimension_semantics=("parallel",),
        ),
    )(xT, w1.astype(compute_dtype), b1, w2col, b2)

    return outT[:, :B].T                                            # (B, 1)


def init_params(key):
    # Deterministic init mimicking PyTorch's default U(-1/sqrt(fan_in), +1/sqrt(fan_in)).
    k1, k2, k3, k4 = jax.random.split(key, 4)
    in1, out1 = 10, 50
    in2, out2 = 50, 1
    bound1 = 1.0 / jnp.sqrt(in1)
    bound2 = 1.0 / jnp.sqrt(in2)
    w1 = jax.random.uniform(k1, (out1, in1), jnp.float32, -bound1, bound1)   # (50, 10)
    b1 = jax.random.uniform(k2, (out1, 1), jnp.float32, -bound1, bound1)     # (50, 1)
    w2col = jax.random.uniform(k3, (in2, out2), jnp.float32, -bound2, bound2)  # (50, 1)
    b2 = jax.random.uniform(k4, (1, 1), jnp.float32, -bound2, bound2)        # (1, 1)
    return w1, b1, w2col, b2


if __name__ == "__main__":
    key = jax.random.PRNGKey(0)
    kx, kp = jax.random.split(key)

    # Small batch (not a multiple of the tile, to exercise the padding path).
    B = 200
    x = jax.random.normal(kx, (B, 10), jnp.float32)
    w1, b1, w2col, b2 = init_params(kp)

    out = mynet_forward(x, w1, b1, w2col, b2, tb=128)
    jax.block_until_ready(out)

    # Reference in plain JAX (PyTorch semantics: y = relu(x @ W1^T + b1) @ W2^T + b2).
    ref = jnp.maximum(x @ w1.T + b1.T, 0.0) @ w2col + b2[0, 0]
    assert out.shape == (B, 1)
    assert jnp.allclose(out, ref, atol=2e-4, rtol=2e-4)

    print("KERNEL_OK")
</pallas_src>

<mosaic_0001>
module attributes {stable_mosaic.version = 11 : i64} {
  func.func @mlp_kernel(%arg0: i32, %arg1: memref<10x128xf32, #tpu.memory_space<vmem>>, %arg2: memref<50x10xf32, #tpu.memory_space<vmem>>, %arg3: memref<50x1xf32, #tpu.memory_space<vmem>>, %arg4: memref<50x1xf32, #tpu.memory_space<vmem>>, %arg5: memref<1x1xf32, #tpu.memory_space<smem>>, %arg6: memref<1x128xf32, #tpu.memory_space<vmem>>) attributes {dimension_semantics = [#tpu.dimension_semantics<parallel>], iteration_bounds = array<i64: 2>, scalar_prefetch = 0 : i64, scratch_operands = 0 : i64, tpu.core_type = #tpu.core_type<tc>, window_params = [{transform_indices = @transform_0, window_bounds = array<i64: 10, 128>}, {pipeline_mode = #tpu.pipeline_mode<synchronous>, transform_indices = @transform_1, window_bounds = array<i64: 50, 10>}, {pipeline_mode = #tpu.pipeline_mode<synchronous>, transform_indices = @transform_2, window_bounds = array<i64: 50, 1>}, {pipeline_mode = #tpu.pipeline_mode<synchronous>, transform_indices = @transform_3, window_bounds = array<i64: 50, 1>}, {transform_indices = @transform_4, window_bounds = array<i64: 1, 1>}, {transform_indices = @transform_5, window_bounds = array<i64: 1, 128>}]} {
    %c0 = arith.constant 0 : index
    %c0_0 = arith.constant 0 : index
    %0 = vector.load %arg2[%c0, %c0_0] : memref<50x10xf32, #tpu.memory_space<vmem>>, vector<50x10xf32>
    %c0_1 = arith.constant 0 : index
    %c0_2 = arith.constant 0 : index
    %1 = vector.load %arg1[%c0_1, %c0_2] : memref<10x128xf32, #tpu.memory_space<vmem>>, vector<10x128xf32>
    %cst = arith.constant dense<0.000000e+00> : vector<50x128xf32>
    %2 = tpu.matmul %0, %1, %cst {dimension_numbers = #tpu.dot_dimension_numbers<[1], [0], [0], [1], [0, 0, 1, 1], [], []>} : vector<50x10xf32>, vector<10x128xf32>, vector<50x128xf32> -> vector<50x128xf32>
    %c0_3 = arith.constant 0 : index
    %c0_4 = arith.constant 0 : index
    %3 = vector.load %arg3[%c0_3, %c0_4] : memref<50x1xf32, #tpu.memory_space<vmem>>, vector<50x1xf32>
    %4 = vector.broadcast %3 : vector<50x1xf32> to vector<50x128xf32>
    %5 = arith.addf %2, %4 : vector<50x128xf32>
    %cst_5 = arith.constant 0.000000e+00 : f32
    %6 = vector.broadcast %cst_5 : f32 to vector<50x128xf32>
    %7 = arith.maximumf %5, %6 : vector<50x128xf32>
    %c0_6 = arith.constant 0 : index
    %c0_7 = arith.constant 0 : index
    %8 = vector.load %arg4[%c0_6, %c0_7] : memref<50x1xf32, #tpu.memory_space<vmem>>, vector<50x1xf32>
    %9 = vector.broadcast %8 : vector<50x1xf32> to vector<50x128xf32>
    %10 = arith.mulf %7, %9 : vector<50x128xf32>
    %cst_8 = arith.constant dense<0.000000e+00> : vector<128xf32>
    %11 = vector.multi_reduction <add>, %10, %cst_8 [0] : vector<50x128xf32> to vector<128xf32>
    %12 = vector.shape_cast %11 : vector<128xf32> to vector<1x128xf32>
    %c0_9 = arith.constant 0 : index
    %c0_10 = arith.constant 0 : index
    %13 = memref.load %arg5[%c0_9, %c0_10] : memref<1x1xf32, #tpu.memory_space<smem>>
    %14 = vector.broadcast %13 : f32 to vector<1x128xf32>
    %15 = arith.addf %12, %14 : vector<1x128xf32>
    %c0_11 = arith.constant 0 : index
    %c0_12 = arith.constant 0 : index
    %16 = vector.load %arg6[%c0_11, %c0_12] : memref<1x128xf32, #tpu.memory_space<vmem>>, vector<1x128xf32>
    tpu.vector_store %arg6[%c0_11, %c0_12], %15 {strides = array<i32>} : memref<1x128xf32, #tpu.memory_space<vmem>>, vector<1x128xf32>,
    return
  }
  func.func @transform_0(%arg0: i32) -> (i32, i32) {
    %c0_i32 = arith.constant 0 : i32
    %c0_i32_0 = arith.constant 0 : i32
    return %c0_i32, %arg0 : i32, i32
  }
  func.func @transform_1(%arg0: i32) -> (i32, i32) {
    %c0_i32 = arith.constant 0 : i32
    %c0_i32_0 = arith.constant 0 : i32
    %c0_i32_1 = arith.constant 0 : i32
    return %c0_i32, %c0_i32_0 : i32, i32
  }
  func.func @transform_2(%arg0: i32) -> (i32, i32) {
    %c0_i32 = arith.constant 0 : i32
    %c0_i32_0 = arith.constant 0 : i32
    %c0_i32_1 = arith.constant 0 : i32
    return %c0_i32, %c0_i32_0 : i32, i32
  }
  func.func @transform_3(%arg0: i32) -> (i32, i32) {
    %c0_i32 = arith.constant 0 : i32
    %c0_i32_0 = arith.constant 0 : i32
    %c0_i32_1 = arith.constant 0 : i32
    return %c0_i32, %c0_i32_0 : i32, i32
  }
  func.func @transform_4(%arg0: i32) -> (i32, i32) {
    %c0_i32 = arith.constant 0 : i32
    %c0_i32_0 = arith.constant 0 : i32
    %c0_i32_1 = arith.constant 0 : i32
    return %c0_i32, %c0_i32_0 : i32, i32
  }
  func.func @transform_5(%arg0: i32) -> (i32, i32) {
    %c0_i32 = arith.constant 0 : i32
    %c0_i32_0 = arith.constant 0 : i32
    return %c0_i32, %arg0 : i32, i32
  }
}

</mosaic_0001>

<llo_original>
// kernel: tpu_custom_call.1
$region0: #{tpu_custom_call.1}
  #allocation0 [shape = 'u32[]', space=smem, size = 0x4, offset = 0x4, fixed_abs, tag = 'smem constant byte address 0x4 - core index']
  #allocation1 [shape = 'u32[144,128]{1,0:T(1,128)}', space=vmem, size = 0x12000, scoped, tag = 'internal scratch']
  #allocation2 [shape = 'f32[1,1]{1,0:T(1,128)S(6)}', space=smem, size = 0x200, scoped, tag = 'scoped memory for tpu_custom_call.1']
  %s0 = inlined_call_operand.vmem [shape: f32[10,256], index: 0, kind: input, shape index: {}]
  %s1 = inlined_call_operand.vmem [shape: f32[50,10], index: 1, kind: input, shape index: {}]
  %s2 = inlined_call_operand.vmem [shape: f32[50,1], index: 2, kind: input, shape index: {}]
  %s3 = inlined_call_operand.vmem [shape: f32[50,1], index: 3, kind: input, shape index: {}]
  %s4 = inlined_call_operand.<no memory space> [shape: f32[1,1], index: 4, kind: input, shape index: {}]
  %s5 = inlined_call_operand.hbm [shape: f32[1,256], index: 5, kind: output, shape index: {}]
  %s6 = sld [smem:[#allocation0]]
  $region91: #{tpu_custom_call.1} parent=0
    _
  %s8 = ssub.s32 1, %s6
  %s9 = scalar_select 0, %s8, %s6
  %10 = sst [smem:[#allocation2]] %s4
  $region1: #{tpu_custom_call.1} parent=0
    #allocation3 [shape = 'u8[16384]{0}', space=vmem, size = 0x4000, scoped, tag = 'input window, operand 0']
    #allocation4 [shape = 'u8[1024]{0}', space=vmem, size = 0x400, scoped, tag = 'output window, operand 0']
    #allocation5 [shape = 's32[2]{0}', space=sflag, size = 0x8, scoped, tag = 'scoped memory for tpu_custom_call.1']
    %11 = vsyncpa [#allocation5], 0
    %s12 = scalar_lea.sflag [#allocation5], 1
    %13 = vsyncpa %s12, 0
    loop: start=0, step=1, limit=4
    $region2: #{tpu_custom_call.1} parent=1 // loop_pre_header
      _
    $region3: #{tpu_custom_call.1} parent=1 // loop_header
      %s15 = sphi 0, %s19
      %p16 = scmp.ge.s32.totalorder %s15, 4
      %s25 = sphi 0, %s27
      %s28 = sphi 0, %s25
      %s29 = sphi 0, %s28
      %s45 = sphi 0, %s29
      %s49 = sphi 0, %s49
      %s51 = sphi 0, %s49
      %s52 = sphi 0, %s51
      %s66 = sphi 0, %s52
      %s70 = sphi 0, %s70
      %s72 = sphi 0, %s70
      %s73 = sphi 0, %s72
      %s87 = sphi 0, %s73
      %s91 = sphi 0, %s91
      %s93 = sphi 0, %s91
      %s94 = sphi 0, %s93
      %s108 = sphi 0, %s94
      %s112 = sphi 0, %s112
      %s114 = sphi 0, %s112
      %s115 = sphi 0, %s114
      %s129 = sphi 0, %s115
      %s135 = sphi 0, %s137
      %s138 = sphi 0, %s135
      %s139 = sphi 0, %s138
      %s155 = sphi 0, %s139
    $region4: #{tpu_custom_call.1} parent=1 // loop_header_branch
      %18 = sbr.rel (%p16) target = $region8
    $region5: #{tpu_custom_call.1} parent=1 // loop_body
      %s20 = ssub.s32 %s15, 1
      %s21 = ssub.s32 %s15, 2
      %s22 = sadd.s32 %s15, 1
      %s23 = ssub.s32 %s15, %s22
      %p24 = scmp.eq.s32.totalorder %s23, 0
      %s26 = sadd.s32 %s25, 1
      %s27 = scalar_select %p24, %s25, %s26
      %p30 = pneg %p24
      %p31 = scmp.eq.s32.totalorder %s15, 1
      %p32 = por %p30, %p31
      %p33 = scmp.ne.s32.totalorder %s25, %s28
      %p34 = scmp.eq.s32.totalorder %s15, 0
      %p35 = por %p33, %p34
      %p36 = scmp.ne.s32.totalorder %s25, %s28
      %p37 = scmp.eq.s32.totalorder %s20, 1
      %p38 = por %p36, %p37
      %p39 = scmp.ne.s32.totalorder %s28, %s29
      %p40 = scmp.eq.s32.totalorder %s20, 0
      %p41 = por %p39, %p40
      %p42 = scmp.ne.s32.totalorder %s28, %s29
      %p43 = scmp.eq.s32.totalorder %s21, 1
      %p44 = por %p42, %p43
      %p46 = scmp.ne.s32.totalorder %s29, %s45
      %p47 = scmp.eq.s32.totalorder %s21, 0
      %p48 = por %p46, %p47
      %s50 = sadd.s32 %s49, 1
      %p53 = scmp.eq.s32.totalorder %s15, 1
      %p54 = scmp.ne.s32.totalorder %s49, %s51
      %p55 = scmp.eq.s32.totalorder %s15, 0
      %p56 = por %p54, %p55
      %p57 = scmp.ne.s32.totalorder %s49, %s51
      %p58 = scmp.eq.s32.totalorder %s20, 1
      %p59 = por %p57, %p58
      %p60 = scmp.ne.s32.totalorder %s51, %s52
      %p61 = scmp.eq.s32.totalorder %s20, 0
      %p62 = por %p60, %p61
      %p63 = scmp.ne.s32.totalorder %s51, %s52
      %p64 = scmp.eq.s32.totalorder %s21, 1
      %p65 = por %p63, %p64
      %p67 = scmp.ne.s32.totalorder %s52, %s66
      %p68 = scmp.eq.s32.totalorder %s21, 0
      %p69 = por %p67, %p68
      %s71 = sadd.s32 %s70, 1
      %p74 = scmp.eq.s32.totalorder %s15, 1
      %p75 = scmp.ne.s32.totalorder %s70, %s72
      %p76 = scmp.eq.s32.totalorder %s15, 0
      %p77 = por %p75, %p76
      %p78 = scmp.ne.s32.totalorder %s70, %s72
      %p79 = scmp.eq.s32.totalorder %s20, 1
      %p80 = por %p78, %p79
      %p81 = scmp.ne.s32.totalorder %s72, %s73
      %p82 = scmp.eq.s32.totalorder %s20, 0
      %p83 = por %p81, %p82
      %p84 = scmp.ne.s32.totalorder %s72, %s73
      %p85 = scmp.eq.s32.totalorder %s21, 1
      %p86 = por %p84, %p85
      %p88 = scmp.ne.s32.totalorder %s73, %s87
      %p89 = scmp.eq.s32.totalorder %s21, 0
      %p90 = por %p88, %p89
      %s92 = sadd.s32 %s91, 1
      %p95 = scmp.eq.s32.totalorder %s15, 1
      %p96 = scmp.ne.s32.totalorder %s91, %s93
      %p97 = scmp.eq.s32.totalorder %s15, 0
      %p98 = por %p96, %p97
      %p99 = scmp.ne.s32.totalorder %s91, %s93
      %p100 = scmp.eq.s32.totalorder %s20, 1
      %p101 = por %p99, %p100
      %p102 = scmp.ne.s32.totalorder %s93, %s94
      %p103 = scmp.eq.s32.totalorder %s20, 0
      %p104 = por %p102, %p103
      %p105 = scmp.ne.s32.totalorder %s93, %s94
      %p106 = scmp.eq.s32.totalorder %s21, 1
      %p107 = por %p105, %p106
      %p109 = scmp.ne.s32.totalorder %s94, %s108
      %p110 = scmp.eq.s32.totalorder %s21, 0
      %p111 = por %p109, %p110
      %s113 = sadd.s32 %s112, 1
      %p116 = scmp.eq.s32.totalorder %s15, 1
      %p117 = scmp.ne.s32.totalorder %s112, %s114
      %p118 = scmp.eq.s32.totalorder %s15, 0
      %p119 = por %p117, %p118
      %p120 = scmp.ne.s32.totalorder %s112, %s114
      %p121 = scmp.eq.s32.totalorder %s20, 1
      %p122 = por %p120, %p121
      %p123 = scmp.ne.s32.totalorder %s114, %s115
      %p124 = scmp.eq.s32.totalorder %s20, 0
      %p125 = por %p123, %p124
      %p126 = scmp.ne.s32.totalorder %s114, %s115
      %p127 = scmp.eq.s32.totalorder %s21, 1
      %p128 = por %p126, %p127
      %p130 = scmp.ne.s32.totalorder %s115, %s129
      %p131 = scmp.eq.s32.totalorder %s21, 0
      %p132 = por %p130, %p131
      %s133 = ssub.s32 %s15, %s22
      %p134 = scmp.eq.s32.totalorder %s133, 0
      %s136 = sadd.s32 %s135, 1
      %s137 = scalar_select %p134, %s135, %s136
      %p140 = pneg %p134
      %p141 = scmp.eq.s32.totalorder %s15, 1
      %p142 = por %p140, %p141
      %p143 = scmp.ne.s32.totalorder %s135, %s138
      %p144 = scmp.eq.s32.totalorder %s15, 0
      %p145 = por %p143, %p144
      %p146 = scmp.ne.s32.totalorder %s135, %s138
      %p147 = scmp.eq.s32.totalorder %s20, 1
      %p148 = por %p146, %p147
      %p149 = scmp.ne.s32.totalorder %s138, %s139
      %p150 = scmp.eq.s32.totalorder %s20, 0
      %p151 = por %p149, %p150
      %p152 = scmp.ne.s32.totalorder %s138, %s139
      %p153 = scmp.eq.s32.totalorder %s21, 1
      %p154 = por %p152, %p153
      %p156 = scmp.ne.s32.totalorder %s139, %s155
      %p157 = scmp.eq.s32.totalorder %s21, 0
      %p158 = por %p156, %p157
      %p159 = scmp.le.s32.totalorder 1, %s15
      %p160 = scmp.lt.s32.totalorder %s15, 3
      %p161 = pnand %p159, %p160
      %p162 = pneg %p161
      // Predicated region
      $region9: #{tpu_custom_call.1} parent=5 // pred_check
        _
      $region10: #{tpu_custom_call.1} parent=5 // pred_check_branch
        %164 = sbr.rel (%p161) target = $region12
      $region11: #{tpu_custom_call.1} parent=5 // pred_region
        %s165 = ssub.s32 %s15, 1
        // Predicated region
        $region13: #{tpu_custom_call.1} parent=11 // pred_check
          %p166 = pneg %p62
        $region14: #{tpu_custom_call.1} parent=11 // pred_check_branch
          %168 = sbr.rel (%p166) target = $region16
        $region15: #{tpu_custom_call.1} parent=11 // pred_region
          _
        $region16: #{tpu_custom_call.1} parent=11 // pred_fallthru
          _
        // Predicated region
        $region17: #{tpu_custom_call.1} parent=11 // pred_check
          %p169 = pneg %p83
        $region18: #{tpu_custom_call.1} parent=11 // pred_check_branch
          %171 = sbr.rel (%p169) target = $region20
        $region19: #{tpu_custom_call.1} parent=11 // pred_region
          _
        $region20: #{tpu_custom_call.1} parent=11 // pred_fallthru
          _
        // Predicated region
        $region21: #{tpu_custom_call.1} parent=11 // pred_check
          %p172 = pneg %p104
        $region22: #{tpu_custom_call.1} parent=11 // pred_check_branch
          %174 = sbr.rel (%p172) target = $region24
        $region23: #{tpu_custom_call.1} parent=11 // pred_region
          _
        $region24: #{tpu_custom_call.1} parent=11 // pred_fallthru
          _
        // Predicated region
        $region25: #{tpu_custom_call.1} parent=11 // pred_check
          %p175 = pneg %p125
        $region26: #{tpu_custom_call.1} parent=11 // pred_check_branch
          %177 = sbr.rel (%p175) target = $region28
        $region27: #{tpu_custom_call.1} parent=11 // pred_region
          _
        $region28: #{tpu_custom_call.1} parent=11 // pred_fallthru
          _
      $region12: #{tpu_custom_call.1} parent=5 // pred_fallthru
        _
      %p178 = scmp.lt.s32.totalorder %s15, 2
      // Predicated region
      $region29: #{tpu_custom_call.1} parent=5 // pred_check
        %p179 = pneg %p178
      $region30: #{tpu_custom_call.1} parent=5 // pred_check_branch
        %181 = sbr.rel (%p179) target = $region32
      $region31: #{tpu_custom_call.1} parent=5 // pred_region
        // Predicated region
        $region33: #{tpu_custom_call.1} parent=31 // pred_check
          %p182 = pneg %p35
        $region34: #{tpu_custom_call.1} parent=31 // pred_check_branch
          %184 = sbr.rel (%p182) target = $region36
        $region35: #{tpu_custom_call.1} parent=31 // pred_region
          %s185 = sand.u32 %s25, 1
          %s186 = sand.u32 %s25, 1
          %s187 = smul.addr %s186, 16
          %s188 = scalar_lea.vmem [#allocation3], %s187
          %s189 = smul.addr %s15, 8
          %s190 = scalar_lea.vmem %s0, %s189
          // Predicated region
          $region37: #{tpu_custom_call.1} parent=35 // pred_check
            _
          $region38: #{tpu_custom_call.1} parent=35 // pred_check_branch
            %192 = sbr.rel (0) target = $region40
          $region39: #{tpu_custom_call.1} parent=35 // pred_region
            // Predicated region
            $region41: #{tpu_custom_call.1} parent=39 // pred_check
              _
            $region42: #{tpu_custom_call.1} parent=39 // pred_check_branch
              %194 = sbr.rel (0) target = $region44
            $region43: #{tpu_custom_call.1} parent=39 // pred_region
              // Predicated region
              $region56: #{tpu_custom_call.1} parent=43 // pred_check
                _
              $region57: #{tpu_custom_call.1} parent=43 // pred_check_branch
                %211 = sbr.rel (0) target = $region59
              $region58: #{tpu_custom_call.1} parent=43 // pred_region
                loop: start=0, step=1, limit=1
                $region60: #{tpu_custom_call.1} parent=58 // loop_pre_header
                  _
                $region61: #{tpu_custom_call.1} parent=58 // loop_header
                  %s213 = sphi 0, %s217
                  %p214 = scmp.ge.s32.totalorder %s213, 1
                  %s218 = sphi %s190, %s190
                  %s219 = sphi %s188, %s188
                $region62: #{tpu_custom_call.1} parent=58 // loop_header_branch
                  %216 = sbr.rel (%p214) target = $region66
                $region63: #{tpu_custom_call.1} parent=58 // loop_body
                  %v220 = vld [vmem:[%s218] sm:$0xff]
                  %221 = vst [vmem:[%s219] sm:$0xff] %v220
                  %v222 = vld [vmem:[%s218 + $0x10] sm:$0xff]
                  %223 = vst [vmem:[%s219 + $0x8] sm:$0xff] %v222
                $region64: #{tpu_custom_call.1} parent=58 // loop_footer
                  %s217 = sadd.s32 1, %s213
                $region65: #{tpu_custom_call.1} parent=58 // loop_footer_branch
                  %212 = sbr.rel target = $region61
                $region66: #{tpu_custom_call.1} parent=58 // loop_exit
                  _
              $region59: #{tpu_custom_call.1} parent=43 // pred_fallthru
                _
              // Predicated region
              $region67: #{tpu_custom_call.1} parent=43 // pred_check
                _
              $region68: #{tpu_custom_call.1} parent=43 // pred_check_branch
                %225 = sbr.rel target = $region70
              $region69: #{tpu_custom_call.1} parent=43 // pred_region
                _
              $region70: #{tpu_custom_call.1} parent=43 // pred_fallthru
                _
            $region44: #{tpu_custom_call.1} parent=39 // pred_fallthru
              _
            // Predicated region
            $region45: #{tpu_custom_call.1} parent=39 // pred_check
              _
            $region46: #{tpu_custom_call.1} parent=39 // pred_check_branch
              %196 = sbr.rel target = $region48
            $region47: #{tpu_custom_call.1} parent=39 // pred_region
              loop: start=0, step=1, limit=1
              $region49: #{tpu_custom_call.1} parent=47 // loop_pre_header
                _
              $region50: #{tpu_custom_call.1} parent=47 // loop_header
                %s199 = sphi 0, %s203
                %p200 = scmp.ge.s32.totalorder %s199, 1
                %s204 = sphi %s190, %s190
                %s205 = sphi %s188, %s188
              $region51: #{tpu_custom_call.1} parent=47 // loop_header_branch
                %202 = sbr.rel (%p200) target = $region55
              $region52: #{tpu_custom_call.1} parent=47 // loop_body
                %v206 = vld [vmem:[%s204] sm:$0xff]
                %207 = vst [vmem:[%s205] sm:$0xff] %v206
                %v208 = vld [vmem:[%s204 + $0x10] sm:$0xff]
                %209 = vst [vmem:[%s205 + $0x8] sm:$0xff] %v208
              $region53: #{tpu_custom_call.1} parent=47 // loop_footer
                %s203 = sadd.s32 1, %s199
              $region54: #{tpu_custom_call.1} parent=47 // loop_footer_branch
                %198 = sbr.rel target = $region50
              $region55: #{tpu_custom_call.1} parent=47 // loop_exit
                _
            $region48: #{tpu_custom_call.1} parent=39 // pred_fallthru
              _
          $region40: #{tpu_custom_call.1} parent=35 // pred_fallthru
            _
          %226 = vnop
        $region36: #{tpu_custom_call.1} parent=31 // pred_fallthru
          _
      $region32: #{tpu_custom_call.1} parent=5 // pred_fallthru
        _
      %p227 = scmp.le.s32.totalorder 1, %s15
      %p228 = scmp.lt.s32.totalorder %s15, 3
      %p229 = pnand %p227, %p228
      %p230 = pneg %p229
      // Predicated region
      $region71: #{tpu_custom_call.1} parent=5 // pred_check
        _
      $region72: #{tpu_custom_call.1} parent=5 // pred_check_branch
        %232 = sbr.rel (%p229) target = $region74
      $region73: #{tpu_custom_call.1} parent=5 // pred_region
        %s233 = ssub.s32 %s15, 1
        %s234 = sand.u32 %s28, 1
        %s235 = sand.u32 %s28, 1
        %s236 = smul.addr %s235, 16
        %s237 = scalar_lea.vmem [#allocation3], %s236
        // Predicated region
        $region75: #{tpu_custom_call.1} parent=73 // pred_check
          %p238 = pneg %p41
        $region76: #{tpu_custom_call.1} parent=73 // pred_check_branch
          %240 = sbr.rel (%p238) target = $region78
        $region77: #{tpu_custom_call.1} parent=73 // pred_region
          _
        $region78: #{tpu_custom_call.1} parent=73 // pred_fallthru
          _
        %s241 = sand.u32 %s28, 1
        %s242 = sand.u32 %s28, 1
        %s243 = smul.addr %s242, 16
        %s244 = scalar_lea.vmem [#allocation3], %s243
        %p245 = pneg %p41
        %p246 = pneg %p38
        %p247 = pneg %p62
        %p248 = pneg %p59
        %p249 = pneg %p83
        %p250 = pneg %p80
        %p251 = pneg %p104
        %p252 = pneg %p101
        %p253 = pneg %p125
        %p254 = pneg %p122
        %p255 = pneg %p151
        %p256 = pneg %p148
        %s257 = sand.u32 %s138, 1
        %s258 = scalar_lea.sflag [#allocation5], %s257
        %s259 = sand.u32 %s138, 1
        %s260 = scalar_lea.vmem [#allocation4], %s259
        %v261 = vld [vmem:[%s1] sm:$0xff]
        %v262 = vld [vmem:[%s1 + $0x8] sm:$0xff]
        %v263 = vld [vmem:[%s1 + $0x10] sm:$0xff]
        %v264 = vld [vmem:[%s1 + $0x18] sm:$0xff]
        %v265 = vld [vmem:[%s1 + $0x20] sm:$0xff]
        %v266 = vld [vmem:[%s1 + $0x28] sm:$0xff]
        %v267 = vld [vmem:[%s1 + $0x30] sm:$0x3]
        %v268 = vld [vmem:[%s237] sm:$0xff]
        %v269 = vld [vmem:[%s237 + $0x8] sm:$0x3]
        %v270 = vld [vmem:[%s2] sm:$0xff]
        %v271 = vld [vmem:[%s2 + $0x8] sm:$0xff]
        %v272 = vld [vmem:[%s2 + $0x10] sm:$0xff]
        %v273 = vld [vmem:[%s2 + $0x18] sm:$0xff]
        %v274 = vld [vmem:[%s2 + $0x20] sm:$0xff]
        %v275 = vld [vmem:[%s2 + $0x28] sm:$0xff]
        %v276 = vld [vmem:[%s2 + $0x30] sm:$0x3]
        %278 = vset.pattern.permute.xlu0 0
        %279 = vperm.xlu0 %278, %v270
        %v280 = vpop.permute.xlu0 %279
        %283 = vset.pattern.permute.xlu0 0
        %284 = vperm.xlu0 %283, %v271
        %v285 = vpop.permute.xlu0 %284
        %288 = vset.pattern.permute.xlu0 0
        %289 = vperm.xlu0 %288, %v272
        %v290 = vpop.permute.xlu0 %289
        %293 = vset.pattern.permute.xlu0 0
        %294 = vperm.xlu0 %293, %v273
        %v295 = vpop.permute.xlu0 %294
        %298 = vset.pattern.permute.xlu0 0
        %299 = vperm.xlu0 %298, %v274
        %v300 = vpop.permute.xlu0 %299
        %303 = vset.pattern.permute.xlu0 0
        %304 = vperm.xlu0 %303, %v275
        %v305 = vpop.permute.xlu0 %304
        %308 = vset.pattern.permute.xlu0 0
        %309 = vperm.xlu0 %308, %v276
        %v310 = vpop.permute.xlu0 %309
        %vm312 = vcmask 80896
        %v314 = vsel %vm312, %v261, 0
        %v317 = vsel %vm312, %v262, 0
        %v320 = vsel %vm312, %v263, 0
        %v323 = vsel %vm312, %v264, 0
        %v326 = vsel %vm312, %v265, 0
        %v329 = vsel %vm312, %v266, 0
        %v332 = vsel %vm312, %v267, 0
        %vm334 = vcmask 1041408
        %v336 = vsel %vm334, %v269, 0
        %338 = vmatprep.subr.mxu0 0.0
        %339 = vmatpush1.msra.mxu0 %v268
        %340 = vmatprep.subr.mxu0 0.0
        %341 = vmatpush1.msra.mxu0 %v336
        %342 = vmatprep.subr.mxu0 0.0
        %343 = vmatpush1.msra.mxu0 0.0
        %344 = vmatprep.subr.mxu0 0.0
        %345 = vmatpush1.msra.mxu0 0.0
        %346 = vmatprep.subr.mxu0 0.0
        %347 = vmatpush1.msra.mxu0 0.0
        %348 = vmatprep.subr.mxu0 0.0
        %349 = vmatpush1.msra.mxu0 0.0
        %350 = vmatprep.subr.mxu0 0.0
        %351 = vmatpush1.msra.mxu0 0.0
        %352 = vmatprep.subr.mxu0 0.0
        %353 = vmatpush1.msra.mxu0 0.0
        %354 = vmatprep.subr.mxu0 0.0
        %355 = vmatpush1.msra.mxu0 0.0
        %356 = vmatprep.subr.mxu0 0.0
        %357 = vmatpush1.msra.mxu0 0.0
        %358 = vmatprep.subr.mxu0 0.0
        %359 = vmatpush1.msra.mxu0 0.0
        %360 = vmatprep.subr.mxu0 0.0
        %361 = vmatpush1.msra.mxu0 0.0
        %362 = vmatprep.subr.mxu0 0.0
        %363 = vmatpush1.msra.mxu0 0.0
        %364 = vmatprep.subr.mxu0 0.0
        %365 = vmatpush1.msra.mxu0 0.0
        %366 = vmatprep.subr.mxu0 0.0
        %367 = vmatpush1.msra.mxu0 0.0
        %368 = vmatprep.subr.mxu0 0.0
        %369 = vmatpush1.msra.mxu0 0.0
        %370 = vmatprep.subr.mxu0 0.0
        %371 = vmatpush1.msra.mxu0 0.0
        %372 = vmatprep.subr.mxu0 0.0
        %373 = vmatpush1.msra.mxu0 0.0
        %374 = vmatprep.subr.mxu0 0.0
        %375 = vmatpush1.msra.mxu0 0.0
        %376 = vmatprep.subr.mxu0 0.0
        %377 = vmatpush1.msra.mxu0 0.0
        %378 = vmatprep.subr.mxu0 0.0
        %379 = vmatpush1.msra.mxu0 0.0
        %380 = vmatprep.subr.mxu0 0.0
        %381 = vmatpush1.msra.mxu0 0.0
        %382 = vmatprep.subr.mxu0 0.0
        %383 = vmatpush1.msra.mxu0 0.0
        %384 = vmatprep.subr.mxu0 0.0
        %385 = vmatpush1.msra.mxu0 0.0
        %386 = vmatprep.subr.mxu0 0.0
        %387 = vmatpush1.msra.mxu0 0.0
        %388 = vmatprep.subr.mxu0 0.0
        %389 = vmatpush1.msra.mxu0 0.0
        %390 = vmatprep.subr.mxu0 0.0
        %391 = vmatpush1.msra.mxu0 0.0
        %392 = vmatprep.subr.mxu0 0.0
        %393 = vmatpush1.msra.mxu0 0.0
        %394 = vmatprep.subr.mxu0 0.0
        %395 = vmatpush1.msra.mxu0 0.0
        %396 = vmatprep.subr.mxu0 0.0
        %397 = vmatpush1.msra.mxu0 0.0
        %398 = vmatprep.subr.mxu0 0.0
        %399 = vmatpush1.msra.mxu0 0.0
        %400 = vmatprep.subr.mxu0 0.0
        %401 = vmatpush1.msra.mxu0 0.0
        %402 = vmatprep.mubr.f32.mxu0 0.0
        %403 = vmatmul.mubr.f32.gmra.mrb[0].mxu0 %v314
        %v404 = vpop.f32.mrb[0].mxu0
        %v405 = vadd.f32 %v280, %v404
        %v406 = vpop.f32.mrb[0].mxu0
        %407 = vmatprep.mubr.f32.mxu0 0.0
        %408 = vmatmul.mubr.f32.gmra.mrb[0].mxu0 %v317
        %v409 = vpop.f32.mrb[0].mxu0
        %v410 = vadd.f32 %v285, %v409
        %v411 = vpop.f32.mrb[0].mxu0
        %412 = vmatprep.mubr.f32.mxu0 0.0
        %413 = vmatmul.mubr.f32.gmra.mrb[0].mxu0 %v320
        %v414 = vpop.f32.mrb[0].mxu0
        %v415 = vadd.f32 %v290, %v414
        %v416 = vpop.f32.mrb[0].mxu0
        %417 = vmatprep.mubr.f32.mxu0 0.0
        %418 = vmatmul.mubr.f32.gmra.mrb[0].mxu0 %v323
        %v419 = vpop.f32.mrb[0].mxu0
        %v420 = vadd.f32 %v295, %v419
        %v421 = vpop.f32.mrb[0].mxu0
        %422 = vmatprep.mubr.f32.mxu0 0.0
        %423 = vmatmul.mubr.f32.gmra.mrb[0].mxu0 %v326
        %v424 = vpop.f32.mrb[0].mxu0
        %v425 = vadd.f32 %v300, %v424
        %v426 = vpop.f32.mrb[0].mxu0
        %427 = vmatprep.mubr.f32.mxu0 0.0
        %428 = vmatmul.mubr.f32.gmra.mrb[0].mxu0 %v329
        %v429 = vpop.f32.mrb[0].mxu0
        %v430 = vadd.f32 %v305, %v429
        %v431 = vpop.f32.mrb[0].mxu0
        %432 = vmatprep.mubr.f32.mxu0 0.0
        %433 = vmatmul.mubr.f32.gmra.mrb[0].mxu0 %v332
        %v434 = vpop.f32.mrb[0].mxu0
        %v435 = vadd.f32 %v310, %v434
        %v436 = vpop.f32.mrb[0].mxu0
        %437 = vdwg.mxu0
        %v438 = vmax.f32 %v405, 0.0
        %v439 = vmax.f32 %v410, 0.0
        %v440 = vmax.f32 %v415, 0.0
        %v441 = vmax.f32 %v420, 0.0
        %v442 = vmax.f32 %v425, 0.0
        %v443 = vmax.f32 %v430, 0.0
        %v444 = vmax.f32 %v435, 0.0
        %v445 = vld [vmem:[%s3] sm:$0xff]
        %v446 = vld [vmem:[%s3 + $0x8] sm:$0xff]
        %v447 = vld [vmem:[%s3 + $0x10] sm:$0xff]
        %v448 = vld [vmem:[%s3 + $0x18] sm:$0xff]
        %v449 = vld [vmem:[%s3 + $0x20] sm:$0xff]
        %v450 = vld [vmem:[%s3 + $0x28] sm:$0xff]
        %v451 = vld [vmem:[%s3 + $0x30] sm:$0x3]
        %453 = vset.pattern.permute.xlu0 0
        %454 = vperm.xlu0 %453, %v445
        %v455 = vpop.permute.xlu0 %454
        %458 = vset.pattern.permute.xlu0 0
        %459 = vperm.xlu0 %458, %v446
        %v460 = vpop.permute.xlu0 %459
        %463 = vset.pattern.permute.xlu0 0
        %464 = vperm.xlu0 %463, %v447
        %v465 = vpop.permute.xlu0 %464
        %468 = vset.pattern.permute.xlu0 0
        %469 = vperm.xlu0 %468, %v448
        %v470 = vpop.permute.xlu0 %469
        %473 = vset.pattern.permute.xlu0 0
        %474 = vperm.xlu0 %473, %v449
        %v475 = vpop.permute.xlu0 %474
        %478 = vset.pattern.permute.xlu0 0
        %479 = vperm.xlu0 %478, %v450
        %v480 = vpop.permute.xlu0 %479
        %483 = vset.pattern.permute.xlu0 0
        %484 = vperm.xlu0 %483, %v451
        %v485 = vpop.permute.xlu0 %484
        %v487 = vmul.f32 %v438, %v455
        %v488 = vmul.f32 %v439, %v460
        %v489 = vmul.f32 %v440, %v465
        %v490 = vmul.f32 %v441, %v470
        %v491 = vmul.f32 %v442, %v475
        %v492 = vmul.f32 %v443, %v480
        %v493 = vmul.f32 %v444, %v485
        %v494 = vadd.f32 %v487, %v488
        %v495 = vadd.f32 %v494, %v489
        %v496 = vadd.f32 %v495, %v490
        %v497 = vadd.f32 %v496, %v491
        %v498 = vadd.f32 %v497, %v492
        %v499 = vsel %vm334, %v493, 0.0
        %v500 = vadd.f32 %v498, %v499
        %v501 = vrot.slane %v500, 4
        %v502 = vadd.f32 %v500, %v501
        %v503 = vrot.slane %v502, 2
        %v504 = vadd.f32 %v502, %v503
        %v505 = vrot.slane %v504, 1
        %v506 = vadd.f32 %v504, %v505
        %s507 = sld [smem:[#allocation2]]
        %v508 = vstv %s507
        %v509 = vadd.f32 %v506, %v508
        %510 = vst [vmem:[%s260] sm:$0x1] %v509
        %s511 = sand.u32 %s138, 1
        %s512 = scalar_lea.sflag [#allocation5], %s511
        %s513 = sand.u32 %s138, 1
        %s514 = scalar_lea.vmem [#allocation4], %s513
        // Predicated region
        $region79: #{tpu_custom_call.1} parent=73 // pred_check
          %p515 = pneg %p148
        $region80: #{tpu_custom_call.1} parent=73 // pred_check_branch
          %517 = sbr.rel (%p515) target = $region82
        $region81: #{tpu_custom_call.1} parent=73 // pred_region
          %s519 = ssub.s32 16, 16
          %520 = vsyncadd %s512, %s519
          %s521 = smul.addr %s20, 16
          %s522 = scalar_lea.hbm %s5, %s521
          %s524 = sshll.u32 %s514, 4
          %s525 = int_to_ptr.vmem [resolvable:$true] %s524
          %527 = dma.vmem_to_hbm [thread:$0]  %s525, 16, %s522, %s512
        $region82: #{tpu_custom_call.1} parent=73 // pred_fallthru
          _
      $region74: #{tpu_custom_call.1} parent=5 // pred_fallthru
        _
      %p528 = scmp.le.s32.totalorder 2, %s15
      // Predicated region
      $region83: #{tpu_custom_call.1} parent=5 // pred_check
        %p529 = pneg %p528
      $region84: #{tpu_custom_call.1} parent=5 // pred_check_branch
        %531 = sbr.rel (%p529) target = $region86
      $region85: #{tpu_custom_call.1} parent=5 // pred_region
        %s532 = ssub.s32 %s15, 2
        // Predicated region
        $region87: #{tpu_custom_call.1} parent=85 // pred_check
          %p533 = pneg %p154
        $region88: #{tpu_custom_call.1} parent=85 // pred_check_branch
          %535 = sbr.rel (%p533) target = $region90
        $region89: #{tpu_custom_call.1} parent=85 // pred_region
          %s536 = sand.u32 %s139, 1
          %s537 = scalar_lea.sflag [#allocation5], %s536
          %s538 = sand.u32 %s139, 1
          %s539 = scalar_lea.vmem [#allocation4], %s538
          %540 = dma.done %s537, 16
        $region90: #{tpu_custom_call.1} parent=85 // pred_fallthru
          _
      $region86: #{tpu_custom_call.1} parent=5 // pred_fallthru
        _
    $region6: #{tpu_custom_call.1} parent=1 // loop_footer
      %s19 = sadd.s32 1, %s15
    $region7: #{tpu_custom_call.1} parent=1 // loop_footer_branch
      %14 = sbr.rel target = $region3
    $region8: #{tpu_custom_call.1} parent=1 // loop_exit
      _
    %541 = vsyncpa [#allocation5], 1
    %s542 = scalar_lea.sflag [#allocation5], 1
    %543 = vsyncpa %s542, 1

</llo_original>
